<compile_context>
chip_gen: v5e
topology: v5e:2x2
jax: 0.10.0
libtpu: 0.0.40
codegen_flags: <defaults>
</compile_context>

<pallas_src>
import jax
import jax.numpy as jnp
from jax import lax
from jax.experimental import pallas as pl
from jax.experimental.pallas import tpu as pltpu


def _round_up(v, m):
    return (v + m - 1) // m * m


def _cdiv(a, b):
    return (a + b - 1) // b


def _vmem_capacity_bytes():
    try:
        return int(pltpu.get_tpu_info().vmem_capacity_bytes)
    except Exception:
        return 64 << 20  # conservative (v7x per-TC VMEM)


def _my_loss_kernel(x_ref, y_ref, valid_ref, inv_ref, out_ref, acc_ref):
    # x_ref, y_ref : VMEM (tb, tc)  input dtype (single upcast to f32 below)
    # valid_ref    : VMEM (tb, 1)   int32, number of valid elems per row
    # inv_ref      : VMEM (tb, 1)   f32, 1 / (agent * T * D); 0 for pad rows
    # out_ref      : SMEM (1, 1)    f32 partial sum for this batch block
    # acc_ref      : VMEM (tb, 1)   f32 per-row running sum across the L axis
    j = pl.program_id(1)

    @pl.when(j == 0)
    def _():
        acc_ref[...] = jnp.zeros_like(acc_ref)

    # One cast instead of two (exact for f32 inputs; within tolerance for bf16).
    diff = (x_ref[...] - y_ref[...]).astype(jnp.float32)
    sq = diff * diff

    tc = x_ref.shape[1]
    # (1, tc) column-index row + global offset; broadcast against (tb, 1).
    col = lax.broadcasted_iota(jnp.int32, (1, tc), 1) + j * tc
    masked = jnp.where(col < valid_ref[...], sq, 0.0)
    acc_ref[...] += jnp.sum(masked, axis=1, keepdims=True)

    @pl.when(j == pl.num_programs(1) - 1)
    def _():
        # agent==0 -> inv=inf and acc=0 -> NaN, matching torch's MSELoss on
        # empty tensors.
        out_ref[0, 0] = jnp.sum(acc_ref[...] * inv_ref[...])


def my_loss(x, y, agent):
    """x, y: (B, A, T, D); agent: (B,) ints. Returns scalar float32 loss."""
    B, A, T, D = x.shape
    L = A * T * D

    itemsize = jnp.dtype(x.dtype).itemsize
    sublane = {1: 32, 2: 16, 4: 8}.get(itemsize, 8)

    # --- generation-aware block sizing (budget counted in f32 bytes, since the
    # in-kernel upcast/temporaries dominate VMEM, not the HBM itemsize).
    capacity = _vmem_capacity_bytes()
    budget = int(0.6 * capacity)                 # leave headroom for the compiler
    per_input_bytes = max(1 << 20, budget // 6)  # 2 inputs x 2 buffers + temps

    if sublane * L * 4 <= per_input_bytes:
        tc = L                                   # full last dim: always legal
    else:
        tc = max(128, (per_input_bytes // (4 * sublane)) // 128 * 128)
        tc = min(tc, _round_up(L, 128))
    rows = max(1, per_input_bytes // (4 * tc))

    # Keep >= 2 batch blocks when possible so both v7x TensorCores get work
    # (harmless no-op on single-TC v5e/v6e).
    tb_cap_2tc = max(sublane, _round_up(_cdiv(B, 2), sublane))
    if rows >= B:
        tb = B if B <= tb_cap_2tc else tb_cap_2tc
    else:
        tb = max(sublane, (rows // sublane) * sublane)
        tb = min(tb, tb_cap_2tc)

    nb = _cdiv(B, tb)
    nc = _cdiv(L, tc)
    Bp = nb * tb

    # Big tensors: reshape only (free) — no jnp.pad of x/y.
    x2 = x.reshape(B, L)
    y2 = y.reshape(B, L)

    # Tiny per-row scalars: clamp agent to A (matches torch slicing), pad to Bp
    # with zeros so garbage rows of a partial batch block are masked out.
    agent = jnp.minimum(jnp.asarray(agent).astype(jnp.int32), A)
    valid = (agent * (T * D)).reshape(B, 1)
    inv = (1.0 / (agent.astype(jnp.float32) * jnp.float32(T * D))).reshape(B, 1)
    if Bp > B:
        valid = jnp.pad(valid, ((0, Bp - B), (0, 0)))
        inv = jnp.pad(inv, ((0, Bp - B), (0, 0)))

    vmem_limit = min(int(0.75 * capacity), 96 << 20)

    partials = pl.pallas_call(
        _my_loss_kernel,
        out_shape=jax.ShapeDtypeStruct((nb, 1), jnp.float32),
        grid_spec=pltpu.PrefetchScalarGridSpec(
            num_scalar_prefetch=0,
            grid=(nb, nc),
            in_specs=[
                pl.BlockSpec((tb, tc), lambda i, j: (i, j)),
                pl.BlockSpec((tb, tc), lambda i, j: (i, j)),
                pl.BlockSpec((tb, 1), lambda i, j: (i, 0)),
                pl.BlockSpec((tb, 1), lambda i, j: (i, 0)),
            ],
            out_specs=pl.BlockSpec(
                (1, 1),
                lambda i, j: (i, 0),
                memory_space=pltpu.MemorySpace.SMEM,
            ),
            scratch_shapes=[pltpu.VMEM((tb, 1), jnp.float32)],
        ),
        compiler_params=pltpu.CompilerParams(
            dimension_semantics=("parallel", "arbitrary"),
            vmem_limit_bytes=vmem_limit,
        ),
        cost_estimate=pl.CostEstimate(
            flops=3 * B * L,
            transcendentals=0,
            bytes_accessed=2 * B * L * itemsize + 2 * B * 4 + nb * 4,
        ),
    )(x2, y2, valid, inv)

    return jnp.sum(partials)


def my_loss_ref(x, y, agent):
    """Pure-JAX reference matching the PyTorch loop."""
    loss = jnp.float32(0.0)
    for i in range(x.shape[0]):
        a = int(agent[i])
        tx = x[i, :a].astype(jnp.float32)
        ty = y[i, :a].astype(jnp.float32)
        loss = loss + jnp.mean((tx - ty) ** 2)
    return loss


if __name__ == "__main__":
    key = jax.random.PRNGKey(0)
    k1, k2 = jax.random.split(key)

    B, A, T, D = 2, 4, 8, 2          # batch, max agents, timesteps, coord dim
    x = jax.random.normal(k1, (B, A, T, D), dtype=jnp.float32)
    y = jax.random.normal(k2, (B, A, T, D), dtype=jnp.float32)
    agent = jnp.array([3, 2], dtype=jnp.int32)   # valid agents per batch elem

    out = my_loss(x, y, agent)
    out = jax.block_until_ready(out)

    ref = my_loss_ref(x, y, agent)
    assert jnp.allclose(out, ref, rtol=1e-5, atol=1e-5), (out, ref)

    print("KERNEL_OK")
</pallas_src>

<mosaic_0001>
module attributes {stable_mosaic.version = 11 : i64} {
  func.func @_my_loss_kernel(%arg0: i32, %arg1: i32, %arg2: memref<2x64xf32, #tpu.memory_space<vmem>>, %arg3: memref<2x64xf32, #tpu.memory_space<vmem>>, %arg4: memref<2x1xi32, #tpu.memory_space<vmem>>, %arg5: memref<2x1xf32, #tpu.memory_space<vmem>>, %arg6: memref<1x1xf32, #tpu.memory_space<smem>>, %arg7: memref<2x1xf32, #tpu.memory_space<vmem>>) attributes {dimension_semantics = [#tpu.dimension_semantics<parallel>, #tpu.dimension_semantics<arbitrary>], iteration_bounds = array<i64: 1, 1>, scalar_prefetch = 0 : i64, scratch_operands = 1 : i64, tpu.core_type = #tpu.core_type<tc>, window_params = [{transform_indices = @transform_0, window_bounds = array<i64: 2, 64>}, {transform_indices = @transform_1, window_bounds = array<i64: 2, 64>}, {transform_indices = @transform_2, window_bounds = array<i64: 2, 1>}, {transform_indices = @transform_3, window_bounds = array<i64: 2, 1>}, {transform_indices = @transform_4, window_bounds = array<i64: 1, 1>}]} {
    %c0_i32 = arith.constant 0 : i32
    %0 = arith.cmpi eq, %arg1, %c0_i32 : i32
    %1 = arith.extui %0 : i1 to i32
    %c0_i32_0 = arith.constant 0 : i32
    %2 = arith.cmpi ne, %1, %c0_i32_0 : i32
    scf.if %2 {
      %cst_13 = arith.constant 0.000000e+00 : f32
      %25 = vector.broadcast %cst_13 : f32 to vector<2x1xf32>
      %c0_14 = arith.constant 0 : index
      %c0_15 = arith.constant 0 : index
      %26 = vector.load %arg7[%c0_14, %c0_15] : memref<2x1xf32, #tpu.memory_space<vmem>>, vector<2x1xf32>
      tpu.vector_store %arg7[%c0_14, %c0_15], %25 {strides = array<i32>} : memref<2x1xf32, #tpu.memory_space<vmem>>, vector<2x1xf32>,
    } else {
    }
    %c0 = arith.constant 0 : index
    %c0_1 = arith.constant 0 : index
    %3 = vector.load %arg2[%c0, %c0_1] : memref<2x64xf32, #tpu.memory_space<vmem>>, vector<2x64xf32>
    %c0_2 = arith.constant 0 : index
    %c0_3 = arith.constant 0 : index
    %4 = vector.load %arg3[%c0_2, %c0_3] : memref<2x64xf32, #tpu.memory_space<vmem>>, vector<2x64xf32>
    %5 = arith.subf %3, %4 : vector<2x64xf32>
    %6 = arith.mulf %5, %5 : vector<2x64xf32>
    %7 = tpu.iota {dimensions = array<i32: 1>} : vector<1x64xi32>
    %c64_i32 = arith.constant 64 : i32
    %8 = arith.muli %arg1, %c64_i32 : i32
    %9 = vector.broadcast %8 : i32 to vector<1x64xi32>
    %10 = arith.addi %7, %9 : vector<1x64xi32>
    %c0_4 = arith.constant 0 : index
    %c0_5 = arith.constant 0 : index
    %11 = vector.load %arg4[%c0_4, %c0_5] : memref<2x1xi32, #tpu.memory_space<vmem>>, vector<2x1xi32>
    %12 = vector.broadcast %10 : vector<1x64xi32> to vector<2x64xi32>
    %13 = vector.broadcast %11 : vector<2x1xi32> to vector<2x64xi32>
    %14 = arith.cmpi slt, %12, %13 : vector<2x64xi32>
    %cst = arith.constant 0.000000e+00 : f32
    %15 = vector.broadcast %cst : f32 to vector<2x64xf32>
    %16 = arith.select %14, %6, %15 : vector<2x64xi1>, vector<2x64xf32>
    %c0_6 = arith.constant 0 : index
    %c0_7 = arith.constant 0 : index
    %17 = vector.load %arg7[%c0_6, %c0_7] : memref<2x1xf32, #tpu.memory_space<vmem>>, vector<2x1xf32>
    %cst_8 = arith.constant dense<0.000000e+00> : vector<2xf32>
    %18 = vector.multi_reduction <add>, %16, %cst_8 [1] : vector<2x64xf32> to vector<2xf32>
    %19 = vector.shape_cast %18 : vector<2xf32> to vector<2x1xf32>
    %20 = arith.addf %17, %19 : vector<2x1xf32>
    %c0_9 = arith.constant 0 : index
    %c0_10 = arith.constant 0 : index
    %21 = vector.load %arg7[%c0_9, %c0_10] : memref<2x1xf32, #tpu.memory_space<vmem>>, vector<2x1xf32>
    tpu.vector_store %arg7[%c0_9, %c0_10], %20 {strides = array<i32>} : memref<2x1xf32, #tpu.memory_space<vmem>>, vector<2x1xf32>,
    %c0_i32_11 = arith.constant 0 : i32
    %22 = arith.cmpi eq, %arg1, %c0_i32_11 : i32
    %23 = arith.extui %22 : i1 to i32
    %c0_i32_12 = arith.constant 0 : i32
    %24 = arith.cmpi ne, %23, %c0_i32_12 : i32
    scf.if %24 {
      %c0_13 = arith.constant 0 : index
      %c0_14 = arith.constant 0 : index
      %25 = vector.load %arg7[%c0_13, %c0_14] : memref<2x1xf32, #tpu.memory_space<vmem>>, vector<2x1xf32>
      %c0_15 = arith.constant 0 : index
      %c0_16 = arith.constant 0 : index
      %26 = vector.load %arg5[%c0_15, %c0_16] : memref<2x1xf32, #tpu.memory_space<vmem>>, vector<2x1xf32>
      %27 = arith.mulf %25, %26 : vector<2x1xf32>
      %28 = vector.shape_cast %27 : vector<2x1xf32> to vector<1x2x1xf32>
      %cst_17 = arith.constant dense<0.000000e+00> : vector<1xf32>
      %29 = vector.multi_reduction <add>, %28, %cst_17 [1, 2] : vector<1x2x1xf32> to vector<1xf32>
      %30 = vector.shape_cast %29 : vector<1xf32> to vector<1x1x1xf32>
      %31 = vector.extract %30[0, 0, 0] : f32 from vector<1x1x1xf32>
      %c0_18 = arith.constant 0 : index
      %c0_19 = arith.constant 0 : index
      %32 = memref.load %arg6[%c0_18, %c0_19] : memref<1x1xf32, #tpu.memory_space<smem>>
      memref.store %31, %arg6[%c0_18, %c0_19] : memref<1x1xf32, #tpu.memory_space<smem>>
    } else {
    }
    return
  }
  func.func @transform_0(%arg0: i32, %arg1: i32) -> (i32, i32) {
    %c0_i32 = arith.constant 0 : i32
    return %arg0, %arg1 : i32, i32
  }
  func.func @transform_1(%arg0: i32, %arg1: i32) -> (i32, i32) {
    %c0_i32 = arith.constant 0 : i32
    return %arg0, %arg1 : i32, i32
  }
  func.func @transform_2(%arg0: i32, %arg1: i32) -> (i32, i32) {
    %c0_i32 = arith.constant 0 : i32
    %c0_i32_0 = arith.constant 0 : i32
    return %arg0, %c0_i32 : i32, i32
  }
  func.func @transform_3(%arg0: i32, %arg1: i32) -> (i32, i32) {
    %c0_i32 = arith.constant 0 : i32
    %c0_i32_0 = arith.constant 0 : i32
    return %arg0, %c0_i32 : i32, i32
  }
  func.func @transform_4(%arg0: i32, %arg1: i32) -> (i32, i32) {
    %c0_i32 = arith.constant 0 : i32
    %c0_i32_0 = arith.constant 0 : i32
    return %arg0, %c0_i32 : i32, i32
  }
}

</mosaic_0001>

<llo_original>
// kernel: tpu_custom_call.1
$region0: #{tpu_custom_call.1}
  #allocation0 [shape = 'u32[]', space=smem, size = 0x4, offset = 0x4, fixed_abs, tag = 'smem constant byte address 0x4 - core index']
  #allocation1 [shape = 'u32[72,128]{1,0:T(1,128)}', space=vmem, size = 0x9000, scoped, tag = 'internal scratch']
  #allocation2 [shape = 'f32[2,1]{1,0:T(2,128)}', space=vmem, size = 0x400, scoped, tag = 'scratch operand']
  %s0 = inlined_call_operand.vmem [shape: f32[2,64], index: 0, kind: input, shape index: {}]
  %s1 = inlined_call_operand.vmem [shape: f32[2,64], index: 1, kind: input, shape index: {}]
  %s2 = inlined_call_operand.vmem [shape: s32[2,1], index: 2, kind: input, shape index: {}]
  %s3 = inlined_call_operand.vmem [shape: f32[2,1], index: 3, kind: input, shape index: {}]
  %s4 = inlined_call_operand.hbm [shape: f32[1,1], index: 4, kind: output, shape index: {}]
  %s5 = sld [smem:[#allocation0]]
  $region34: #{tpu_custom_call.1} parent=0
    _
  %s7 = ssub.s32 1, %s5
  %s8 = scalar_select 0, %s7, %s5
  $region1: #{tpu_custom_call.1} parent=0
    #allocation3 [shape = 'u8[512]{0}', space=smem, size = 0x200, scoped, tag = 'output window, operand 0, single buffered']
    #allocation4 [shape = 's32[1]{0}', space=sflag, size = 0x4, scoped, tag = 'scoped memory for tpu_custom_call.1']
    %9 = vsyncpa [#allocation4], 0
    // Predicated region
    $region2: #{tpu_custom_call.1} parent=1 // pred_check
      _
    $region3: #{tpu_custom_call.1} parent=1 // pred_check_branch
      %11 = sbr.rel (0) target = $region5
    $region4: #{tpu_custom_call.1} parent=1 // pred_region
      _
    $region5: #{tpu_custom_call.1} parent=1 // pred_fallthru
      _
    // Predicated region
    $region6: #{tpu_custom_call.1} parent=1 // pred_check
      _
    $region7: #{tpu_custom_call.1} parent=1 // pred_check_branch
      %13 = sbr.rel (0) target = $region9
    $region8: #{tpu_custom_call.1} parent=1 // pred_region
      _
    $region9: #{tpu_custom_call.1} parent=1 // pred_fallthru
      _
    // Predicated region
    $region10: #{tpu_custom_call.1} parent=1 // pred_check
      _
    $region11: #{tpu_custom_call.1} parent=1 // pred_check_branch
      %15 = sbr.rel (0) target = $region13
    $region12: #{tpu_custom_call.1} parent=1 // pred_region
      _
    $region13: #{tpu_custom_call.1} parent=1 // pred_fallthru
      _
    // Predicated region
    $region14: #{tpu_custom_call.1} parent=1 // pred_check
      _
    $region15: #{tpu_custom_call.1} parent=1 // pred_check_branch
      %17 = sbr.rel (0) target = $region17
    $region16: #{tpu_custom_call.1} parent=1 // pred_region
      _
    $region17: #{tpu_custom_call.1} parent=1 // pred_fallthru
      _
    %p18 = scmp.eq.s32.totalorder 0, 0
    // Predicated region
    $region18: #{tpu_custom_call.1} parent=1 // pred_check
      %p19 = pneg %p18
    $region19: #{tpu_custom_call.1} parent=1 // pred_check_branch
      %21 = sbr.rel (%p19) target = $region21
    $region20: #{tpu_custom_call.1} parent=1 // pred_region
      %vm22 = vcmask 1024
      %23 = vst.msk [vmem:[#allocation2] sm:$0x3] %vm22, 0.0
    $region21: #{tpu_custom_call.1} parent=1 // pred_fallthru
      _
    %v24 = vld [vmem:[%s0] sm:$0x3]
    %v25 = vld [vmem:[%s1] sm:$0x3]
    %v26 = vsub.f32 %v24, %v25
    %v27 = vmul.f32 %v26, %v26
    %v28 = vlaneseq
    %v29 = vand.u32 %v28, 127
    %s30 = smul.u32 0, 64
    %v31 = vstv %s30
    %v32 = vadd.s32 %v29, %v31
    %v33 = vld [vmem:[%s2] sm:$0x3]
    %34 = vset.pattern.permute.xlu0 0
    %35 = vperm.xlu0 %34, %v33
    %v36 = vpop.permute.xlu0 %35
    %vm37 = vcmp.lt.s32.totalorder %v32, %v36
    %v38 = vsel %vm37, %v27, 0.0
    %v39 = vld [vmem:[#allocation2] sm:$0x3]
    %vm40 = vcmask 517120
    %v41 = vsel %vm40, %v38, 0.0
    %42 = vadd.xlane.f32.xlu0 %v41
    %v43 = vpop.xlane.xlu0 %42
    %v44 = vadd.f32 %v39, %v43
    %vm45 = vcmask 1024
    %46 = vst.msk [vmem:[#allocation2] sm:$0x3] %vm45, %v44
    // Predicated region
    $region22: #{tpu_custom_call.1} parent=1 // pred_check
      %p47 = pneg %p18
    $region23: #{tpu_custom_call.1} parent=1 // pred_check_branch
      %49 = sbr.rel (%p47) target = $region25
    $region24: #{tpu_custom_call.1} parent=1 // pred_region
      %v50 = vld [vmem:[#allocation2] sm:$0x3]
      %v51 = vld [vmem:[%s3] sm:$0x3]
      %v52 = vmul.f32 %v50, %v51
      %v53 = vsel %vm45, %v52, 0.0
      %54 = vadd.xlane.f32.xlu0 %v53
      %v55 = vpop.xlane.xlu0 %54
      %v56 = vrot.slane %v55, 4
      %v57 = vadd.f32 %v55, %v56
      %v58 = vrot.slane %v57, 2
      %v59 = vadd.f32 %v57, %v58
      %v60 = vrot.slane %v59, 1
      %v61 = vadd.f32 %v59, %v60
      %s62 = vtos %v61
      %s63 = scalar_lea.smem [#allocation3], 0
      %64 = sst [smem:[%s63]] %s62
    $region25: #{tpu_custom_call.1} parent=1 // pred_fallthru
      _
    // Predicated region
    $region26: #{tpu_custom_call.1} parent=1 // pred_check
      _
    $region27: #{tpu_custom_call.1} parent=1 // pred_check_branch
      %66 = sbr.rel (0) target = $region29
    $region28: #{tpu_custom_call.1} parent=1 // pred_region
      %68 = vsyncadd [#allocation4], 0
      %s70 = sshll.u32 %s4, 4
      %s71 = int_to_ptr.hbm [resolvable:$true] %s70
      %73 = dma.smem_to_hbm [#allocation3], 16, %s71, [#allocation4]
    $region29: #{tpu_custom_call.1} parent=1 // pred_fallthru
      _
    // Predicated region
    $region30: #{tpu_custom_call.1} parent=1 // pred_check
      _
    $region31: #{tpu_custom_call.1} parent=1 // pred_check_branch
      %75 = sbr.rel (0) target = $region33
    $region32: #{tpu_custom_call.1} parent=1 // pred_region
      %77 = dma.done [#allocation4], 16
    $region33: #{tpu_custom_call.1} parent=1 // pred_fallthru
      _
    %78 = sfence
    %79 = vsyncpa [#allocation4], 1

</llo_original>
